<compile_context>
chip_gen: v5e
topology: v5e:2x2
jax: 0.10.0
libtpu: 0.0.40
codegen_flags: <defaults>
</compile_context>

<pallas_src>
import functools

import jax
import jax.numpy as jnp
from jax.experimental import pallas as pl
from jax.experimental.pallas import tpu as pltpu


def _ta_kernel(x_ref, w1_ref, w2_ref, out_ref, sum_ref, max_ref, *,
               s_total, tile_s, needs_mask):
    si = pl.program_id(1)
    ns = pl.num_programs(1)

    # Initialize accumulators at the first spatial tile of each batch element.
    @pl.when(si == 0)
    def _init():
        sum_ref[...] = jnp.zeros_like(sum_ref)
        max_ref[...] = jnp.full_like(max_ref, -jnp.inf)

    # Upcast per tile (input stays in its native dtype in HBM / VMEM).
    x = x_ref[...].astype(jnp.float32)                     # (T, TS)

    if needs_mask:
        # Last tile may run past S: mask out-of-bounds lanes so they contribute
        # 0 to the sum and -inf to the max (robust even to NaN garbage).
        lane = jax.lax.broadcasted_iota(jnp.int32, x.shape, 1) + si * tile_s
        valid = lane < s_total
        x_sum = jnp.where(valid, x, 0.0)
        x_max = jnp.where(valid, x, -jnp.inf)
    else:
        x_sum = x
        x_max = x

    sum_ref[...] += jnp.sum(x_sum, axis=1, keepdims=True)                       # (T, 1)
    max_ref[...] = jnp.maximum(max_ref[...], jnp.max(x_max, axis=1, keepdims=True))

    # Finalize on the last spatial tile: mean, fused shared MLP, store.
    @pl.when(si == ns - 1)
    def _finalize():
        avg = sum_ref[...] * jnp.float32(1.0 / s_total)                          # (T, 1)
        pooled = jnp.concatenate([avg, max_ref[...]], axis=1)                    # (T, 2)
        # Shared MLP applied to both branches at once (2 matmuls instead of 4).
        h = jnp.maximum(
            jnp.dot(w1_ref[...], pooled, preferred_element_type=jnp.float32),    # (Th, 2)
            0.0)
        o = jnp.dot(w2_ref[...], h, preferred_element_type=jnp.float32)          # (T, 2)
        res = o[:, 0:1] + o[:, 1:2]                                              # (T, 1)
        out_ref[...] = res[None].astype(out_ref.dtype)                           # (1, T, 1)


def ta_forward(x, w1, w2, *, tile_s=4096):
    """TA.forward.

    x : (N, T, D, H, W)   any float dtype (kept native; upcast in-kernel)
    w1: (T//ratio, T)     Conv3d(T, T//ratio, 1, bias=False) weight (squeezed)
    w2: (T, T//ratio)     Conv3d(T//ratio, T, 1, bias=False) weight (squeezed)
    Returns (N, T, 1, 1, 1), matching TA.forward.
    """
    N, T, D, H, W = x.shape
    S = D * H * W
    Th = w1.shape[0]
    xf = x.reshape(N, T, S)                    # no dtype cast here (HBM traffic)

    # Choose spatial tile: full extent if it already fits comfortably,
    # otherwise a multiple of 128 lanes (sweepable; 2048-4096 good on v5e).
    if S <= tile_s:
        ts = S                                  # full-extent block (rule-exempt)
    else:
        ts = max(128, (tile_s // 128) * 128)
    n_s = pl.cdiv(S, ts)
    needs_mask = (S % ts) != 0

    kernel = functools.partial(
        _ta_kernel, s_total=S, tile_s=ts, needs_mask=needs_mask)

    out = pl.pallas_call(
        kernel,
        out_shape=jax.ShapeDtypeStruct((N, T, 1), x.dtype),
        grid=(N, n_s),
        in_specs=[
            # Leading batch dim squeezed -> kernel sees (T, ts).
            pl.BlockSpec((None, T, ts), lambda n, s: (n, 0, s)),
            pl.BlockSpec((Th, T), lambda n, s: (0, 0)),
            pl.BlockSpec((T, Th), lambda n, s: (0, 0)),
        ],
        out_specs=pl.BlockSpec((1, T, 1), lambda n, s: (n, 0, 0)),
        scratch_shapes=[
            pltpu.VMEM((T, 1), jnp.float32),   # running sum
            pltpu.VMEM((T, 1), jnp.float32),   # running max
        ],
        compiler_params=pltpu.CompilerParams(
            dimension_semantics=("parallel", "arbitrary")),
    )(xf, w1, w2)
    return out.reshape(N, T, 1, 1, 1)


def ta_reference(x, w1, w2):
    # Pure-JAX reference for correctness checking.
    N, T, D, H, W = x.shape
    xf = x.reshape(N, T, -1).astype(jnp.float32)
    avg = jnp.mean(xf, axis=-1)                # (N, T)
    mx = jnp.max(xf, axis=-1)                  # (N, T)

    def mlp(v):                                # v: (N, T)
        h = jnp.maximum(v @ w1.T, 0.0)         # (N, Th)
        return h @ w2.T                        # (N, T)

    out = mlp(avg) + mlp(mx)
    return out.reshape(N, T, 1, 1, 1)


if __name__ == "__main__":
    # Small deterministic example: N=2, T=8 frames, ratio=2, spatial D=4,H=8,W=8.
    N, T, ratio = 2, 8, 2
    D, H, W = 4, 8, 8
    Th = T // ratio

    key = jax.random.PRNGKey(0)
    kx, k1, k2 = jax.random.split(key, 3)
    x = jax.random.normal(kx, (N, T, D, H, W), dtype=jnp.float32)
    # Deterministic synthetic Conv3d 1x1x1 weights (no bias), kaiming-ish scale.
    w1 = jax.random.normal(k1, (Th, T), dtype=jnp.float32) * (2.0 / T) ** 0.5
    w2 = jax.random.normal(k2, (T, Th), dtype=jnp.float32) * (2.0 / Th) ** 0.5

    # tile_s=128 forces 2 spatial tiles (S=256) so the accumulator path is
    # exercised even at this toy size; default tile_s=4096 for real shapes.
    out = ta_forward(x, w1, w2, tile_s=128)
    out = jax.block_until_ready(out)

    ref = ta_reference(x, w1, w2)
    assert out.shape == (N, T, 1, 1, 1)
    assert jnp.allclose(out, ref, atol=1e-5, rtol=1e-5), "mismatch vs reference"

    print("KERNEL_OK")
</pallas_src>

<mosaic_0001>
module attributes {stable_mosaic.version = 11 : i64} {
  func.func @_ta_kernel(%arg0: i32, %arg1: i32, %arg2: memref<1x8x128xf32, #tpu.memory_space<vmem>>, %arg3: memref<4x8xf32, #tpu.memory_space<vmem>>, %arg4: memref<8x4xf32, #tpu.memory_space<vmem>>, %arg5: memref<1x8x1xf32, #tpu.memory_space<vmem>>, %arg6: memref<8x1xf32, #tpu.memory_space<vmem>>, %arg7: memref<8x1xf32, #tpu.memory_space<vmem>>) attributes {dimension_semantics = [#tpu.dimension_semantics<parallel>, #tpu.dimension_semantics<arbitrary>], iteration_bounds = array<i64: 2, 2>, scalar_prefetch = 0 : i64, scratch_operands = 2 : i64, tpu.core_type = #tpu.core_type<tc>, window_params = [{transform_indices = @transform_0, window_bounds = array<i64: 1, 8, 128>}, {pipeline_mode = #tpu.pipeline_mode<synchronous>, transform_indices = @transform_1, window_bounds = array<i64: 4, 8>}, {pipeline_mode = #tpu.pipeline_mode<synchronous>, transform_indices = @transform_2, window_bounds = array<i64: 8, 4>}, {transform_indices = @transform_3, window_bounds = array<i64: 1, 8, 1>}]} {
    %c0_i32 = arith.constant 0 : i32
    %0 = arith.cmpi eq, %arg1, %c0_i32 : i32
    %1 = arith.extui %0 : i1 to i32
    %c0_i32_0 = arith.constant 0 : i32
    %2 = arith.cmpi ne, %1, %c0_i32_0 : i32
    scf.if %2 {
      %cst_13 = arith.constant 0.000000e+00 : f32
      %18 = vector.broadcast %cst_13 : f32 to vector<8x1xf32>
      %c0_14 = arith.constant 0 : index
      %c0_15 = arith.constant 0 : index
      %19 = vector.load %arg6[%c0_14, %c0_15] : memref<8x1xf32, #tpu.memory_space<vmem>>, vector<8x1xf32>
      tpu.vector_store %arg6[%c0_14, %c0_15], %18 {strides = array<i32>} : memref<8x1xf32, #tpu.memory_space<vmem>>, vector<8x1xf32>,
      %cst_16 = arith.constant 0xFF800000 : f32
      %20 = vector.broadcast %cst_16 : f32 to vector<8x1xf32>
      %c0_17 = arith.constant 0 : index
      %c0_18 = arith.constant 0 : index
      %21 = vector.load %arg7[%c0_17, %c0_18] : memref<8x1xf32, #tpu.memory_space<vmem>>, vector<8x1xf32>
      tpu.vector_store %arg7[%c0_17, %c0_18], %20 {strides = array<i32>} : memref<8x1xf32, #tpu.memory_space<vmem>>, vector<8x1xf32>,
    } else {
    }
    %c0 = arith.constant 0 : index
    %c0_1 = arith.constant 0 : index
    %c0_2 = arith.constant 0 : index
    %3 = vector.load %arg2[%c0, %c0_1, %c0_2] : memref<1x8x128xf32, #tpu.memory_space<vmem>>, vector<1x8x128xf32>
    %4 = vector.shape_cast %3 : vector<1x8x128xf32> to vector<8x128xf32>
    %c0_3 = arith.constant 0 : index
    %c0_4 = arith.constant 0 : index
    %5 = vector.load %arg6[%c0_3, %c0_4] : memref<8x1xf32, #tpu.memory_space<vmem>>, vector<8x1xf32>
    %cst = arith.constant dense<0.000000e+00> : vector<8xf32>
    %6 = vector.multi_reduction <add>, %4, %cst [1] : vector<8x128xf32> to vector<8xf32>
    %7 = vector.shape_cast %6 : vector<8xf32> to vector<8x1xf32>
    %8 = arith.addf %5, %7 : vector<8x1xf32>
    %c0_5 = arith.constant 0 : index
    %c0_6 = arith.constant 0 : index
    %9 = vector.load %arg6[%c0_5, %c0_6] : memref<8x1xf32, #tpu.memory_space<vmem>>, vector<8x1xf32>
    tpu.vector_store %arg6[%c0_5, %c0_6], %8 {strides = array<i32>} : memref<8x1xf32, #tpu.memory_space<vmem>>, vector<8x1xf32>,
    %c0_7 = arith.constant 0 : index
    %c0_8 = arith.constant 0 : index
    %10 = vector.load %arg7[%c0_7, %c0_8] : memref<8x1xf32, #tpu.memory_space<vmem>>, vector<8x1xf32>
    %cst_9 = arith.constant dense<0xFF800000> : vector<8xf32>
    %11 = vector.multi_reduction <maximumf>, %4, %cst_9 [1] : vector<8x128xf32> to vector<8xf32>
    %12 = vector.shape_cast %11 : vector<8xf32> to vector<8x1xf32>
    %13 = arith.maximumf %10, %12 : vector<8x1xf32>
    %c0_10 = arith.constant 0 : index
    %c0_11 = arith.constant 0 : index
    %14 = vector.load %arg7[%c0_10, %c0_11] : memref<8x1xf32, #tpu.memory_space<vmem>>, vector<8x1xf32>
    tpu.vector_store %arg7[%c0_10, %c0_11], %13 {strides = array<i32>} : memref<8x1xf32, #tpu.memory_space<vmem>>, vector<8x1xf32>,
    %c1_i32 = arith.constant 1 : i32
    %15 = arith.cmpi eq, %arg1, %c1_i32 : i32
    %16 = arith.extui %15 : i1 to i32
    %c0_i32_12 = arith.constant 0 : i32
    %17 = arith.cmpi ne, %16, %c0_i32_12 : i32
    scf.if %17 {
      %c0_13 = arith.constant 0 : index
      %c0_14 = arith.constant 0 : index
      %18 = vector.load %arg6[%c0_13, %c0_14] : memref<8x1xf32, #tpu.memory_space<vmem>>, vector<8x1xf32>
      %cst_15 = arith.constant 3.906250e-03 : f32
      %19 = vector.broadcast %cst_15 : f32 to vector<8x1xf32>
      %20 = arith.mulf %18, %19 : vector<8x1xf32>
      %c0_16 = arith.constant 0 : index
      %c0_17 = arith.constant 0 : index
      %21 = vector.load %arg7[%c0_16, %c0_17] : memref<8x1xf32, #tpu.memory_space<vmem>>, vector<8x1xf32>
      %22 = tpu.concatenate %20, %21 in 1 : vector<8x1xf32>, vector<8x1xf32> -> vector<8x2xf32>
      %c0_18 = arith.constant 0 : index
      %c0_19 = arith.constant 0 : index
      %23 = vector.load %arg3[%c0_18, %c0_19] : memref<4x8xf32, #tpu.memory_space<vmem>>, vector<4x8xf32>
      %cst_20 = arith.constant dense<0.000000e+00> : vector<4x2xf32>
      %24 = tpu.matmul %23, %22, %cst_20 {dimension_numbers = #tpu.dot_dimension_numbers<[1], [0], [0], [1], [0, 0, 1, 1], [], []>} : vector<4x8xf32>, vector<8x2xf32>, vector<4x2xf32> -> vector<4x2xf32>
      %cst_21 = arith.constant 0.000000e+00 : f32
      %25 = vector.broadcast %cst_21 : f32 to vector<4x2xf32>
      %26 = arith.maximumf %24, %25 : vector<4x2xf32>
      %c0_22 = arith.constant 0 : index
      %c0_23 = arith.constant 0 : index
      %27 = vector.load %arg4[%c0_22, %c0_23] : memref<8x4xf32, #tpu.memory_space<vmem>>, vector<8x4xf32>
      %cst_24 = arith.constant dense<0.000000e+00> : vector<8x2xf32>
      %28 = tpu.matmul %27, %26, %cst_24 {dimension_numbers = #tpu.dot_dimension_numbers<[1], [0], [0], [1], [0, 0, 1, 1], [], []>} : vector<8x4xf32>, vector<4x2xf32>, vector<8x2xf32> -> vector<8x2xf32>
      %29 = vector.extract_strided_slice %28 {offsets = [0, 0], sizes = [8, 1], strides = [1, 1]} : vector<8x2xf32> to vector<8x1xf32>
      %30 = vector.extract_strided_slice %28 {offsets = [0, 1], sizes = [8, 1], strides = [1, 1]} : vector<8x2xf32> to vector<8x1xf32>
      %31 = arith.addf %29, %30 : vector<8x1xf32>
      %32 = vector.shape_cast %31 : vector<8x1xf32> to vector<1x8x1xf32>
      %c0_25 = arith.constant 0 : index
      %c0_26 = arith.constant 0 : index
      %c0_27 = arith.constant 0 : index
      %33 = vector.load %arg5[%c0_25, %c0_26, %c0_27] : memref<1x8x1xf32, #tpu.memory_space<vmem>>, vector<1x8x1xf32>
      tpu.vector_store %arg5[%c0_25, %c0_26, %c0_27], %32 {strides = array<i32>} : memref<1x8x1xf32, #tpu.memory_space<vmem>>, vector<1x8x1xf32>,
    } else {
    }
    return
  }
  func.func @transform_0(%arg0: i32, %arg1: i32) -> (i32, i32, i32) {
    %c0_i32 = arith.constant 0 : i32
    %c0_i32_0 = arith.constant 0 : i32
    return %arg0, %c0_i32, %arg1 : i32, i32, i32
  }
  func.func @transform_1(%arg0: i32, %arg1: i32) -> (i32, i32) {
    %c0_i32 = arith.constant 0 : i32
    %c0_i32_0 = arith.constant 0 : i32
    %c0_i32_1 = arith.constant 0 : i32
    return %c0_i32, %c0_i32_0 : i32, i32
  }
  func.func @transform_2(%arg0: i32, %arg1: i32) -> (i32, i32) {
    %c0_i32 = arith.constant 0 : i32
    %c0_i32_0 = arith.constant 0 : i32
    %c0_i32_1 = arith.constant 0 : i32
    return %c0_i32, %c0_i32_0 : i32, i32
  }
  func.func @transform_3(%arg0: i32, %arg1: i32) -> (i32, i32, i32) {
    %c0_i32 = arith.constant 0 : i32
    %c0_i32_0 = arith.constant 0 : i32
    %c0_i32_1 = arith.constant 0 : i32
    return %arg0, %c0_i32, %c0_i32_0 : i32, i32, i32
  }
}

</mosaic_0001>

<llo_original>
// kernel: tpu_custom_call.1
$region0: #{tpu_custom_call.1}
  #allocation0 [shape = 'u32[]', space=smem, size = 0x4, offset = 0x4, fixed_abs, tag = 'smem constant byte address 0x4 - core index']
  #allocation1 [shape = 'u32[72,128]{1,0:T(1,128)}', space=vmem, size = 0x9000, scoped, tag = 'internal scratch']
  #allocation2 [shape = 'f32[8,1]{1,0:T(8,128)}', space=vmem, size = 0x1000, scoped, tag = 'scratch operand']
  #allocation3 [shape = 'f32[8,1]{1,0:T(8,128)}', space=vmem, size = 0x1000, scoped, tag = 'scratch operand']
  %s0 = inlined_call_operand.hbm [shape: f32[2,8,256], index: 0, kind: input, shape index: {}]
  %s1 = inlined_call_operand.vmem [shape: f32[4,8], index: 1, kind: input, shape index: {}]
  %s2 = inlined_call_operand.vmem [shape: f32[8,4], index: 2, kind: input, shape index: {}]
  %s3 = inlined_call_operand.vmem [shape: f32[2,8,1], index: 3, kind: output, shape index: {}]
  %s4 = sld [smem:[#allocation0]]
  $region57: #{tpu_custom_call.1} parent=0
    _
  %s6 = ssub.s32 1, %s4
  %s7 = scalar_select 0, %s6, %s4
  $region1: #{tpu_custom_call.1} parent=0
    #allocation4 [shape = 'u8[8192]{0}', space=vmem, size = 0x2000, scoped, tag = 'input window, operand 0']
    #allocation5 [shape = 's32[2]{0}', space=sflag, size = 0x8, scoped, tag = 'scoped memory for tpu_custom_call.1']
    %8 = vsyncpa [#allocation5], 0
    %s9 = scalar_lea.sflag [#allocation5], 1
    %10 = vsyncpa %s9, 0
    loop: start=0, step=1, limit=6
    $region2: #{tpu_custom_call.1} parent=1 // loop_pre_header
      _
    $region3: #{tpu_custom_call.1} parent=1 // loop_header
      %s12 = sphi 0, %s16
      %p13 = scmp.ge.s32.totalorder %s12, 6
      %s19 = sphi 0, %s31
      %s20 = sphi 0, %s27
      %s21 = sphi 0, %s19
      %s22 = sphi 0, %s20
      %s23 = sphi 0, %s21
      %s24 = sphi 0, %s22
      %s36 = sphi 0, %s38
      %s39 = sphi 0, %s36
      %s40 = sphi 0, %s39
      %s56 = sphi 0, %s40
      %s60 = sphi 0, %s60
      %s62 = sphi 0, %s60
      %s63 = sphi 0, %s62
      %s77 = sphi 0, %s63
      %s81 = sphi 0, %s81
      %s83 = sphi 0, %s81
      %s84 = sphi 0, %s83
      %s98 = sphi 0, %s84
      %s104 = sphi 0, %s106
      %s107 = sphi 0, %s104
      %s108 = sphi 0, %s107
      %s124 = sphi 0, %s108
    $region4: #{tpu_custom_call.1} parent=1 // loop_header_branch
      %15 = sbr.rel (%p13) target = $region8
    $region5: #{tpu_custom_call.1} parent=1 // loop_body
      %s17 = ssub.s32 %s12, 1
      %s18 = ssub.s32 %s12, 2
      %s25 = sadd.s32 1, %s20
      %p26 = scmp.ge.s32.totalorder %s25, 2
      %s27 = scalar_select %p26, 0, %s25
      %s28 = sadd.s32 1, %s19
      %s29 = scalar_select %p26, %s28, %s19
      %p30 = scmp.ge.s32.totalorder %s29, 2
      %s31 = scalar_select %p30, 0, %s29
      %s32 = ssub.s32 %s19, %s31
      %s33 = ssub.s32 %s20, %s27
      %s34 = sor.u32 %s32, %s33
      %p35 = scmp.eq.s32.totalorder %s34, 0
      %s37 = sadd.s32 %s36, 1
      %s38 = scalar_select %p35, %s36, %s37
      %p41 = pneg %p35
      %p42 = scmp.eq.s32.totalorder %s12, 3
      %p43 = por %p41, %p42
      %p44 = scmp.ne.s32.totalorder %s36, %s39
      %p45 = scmp.eq.s32.totalorder %s12, 0
      %p46 = por %p44, %p45
      %p47 = scmp.ne.s32.totalorder %s36, %s39
      %p48 = scmp.eq.s32.totalorder %s17, 3
      %p49 = por %p47, %p48
      %p50 = scmp.ne.s32.totalorder %s39, %s40
      %p51 = scmp.eq.s32.totalorder %s17, 0
      %p52 = por %p50, %p51
      %p53 = scmp.ne.s32.totalorder %s39, %s40
      %p54 = scmp.eq.s32.totalorder %s18, 3
      %p55 = por %p53, %p54
      %p57 = scmp.ne.s32.totalorder %s40, %s56
      %p58 = scmp.eq.s32.totalorder %s18, 0
      %p59 = por %p57, %p58
      %s61 = sadd.s32 %s60, 1
      %p64 = scmp.eq.s32.totalorder %s12, 3
      %p65 = scmp.ne.s32.totalorder %s60, %s62
      %p66 = scmp.eq.s32.totalorder %s12, 0
      %p67 = por %p65, %p66
      %p68 = scmp.ne.s32.totalorder %s60, %s62
      %p69 = scmp.eq.s32.totalorder %s17, 3
      %p70 = por %p68, %p69
      %p71 = scmp.ne.s32.totalorder %s62, %s63
      %p72 = scmp.eq.s32.totalorder %s17, 0
      %p73 = por %p71, %p72
      %p74 = scmp.ne.s32.totalorder %s62, %s63
      %p75 = scmp.eq.s32.totalorder %s18, 3
      %p76 = por %p74, %p75
      %p78 = scmp.ne.s32.totalorder %s63, %s77
      %p79 = scmp.eq.s32.totalorder %s18, 0
      %p80 = por %p78, %p79
      %s82 = sadd.s32 %s81, 1
      %p85 = scmp.eq.s32.totalorder %s12, 3
      %p86 = scmp.ne.s32.totalorder %s81, %s83
      %p87 = scmp.eq.s32.totalorder %s12, 0
      %p88 = por %p86, %p87
      %p89 = scmp.ne.s32.totalorder %s81, %s83
      %p90 = scmp.eq.s32.totalorder %s17, 3
      %p91 = por %p89, %p90
      %p92 = scmp.ne.s32.totalorder %s83, %s84
      %p93 = scmp.eq.s32.totalorder %s17, 0
      %p94 = por %p92, %p93
      %p95 = scmp.ne.s32.totalorder %s83, %s84
      %p96 = scmp.eq.s32.totalorder %s18, 3
      %p97 = por %p95, %p96
      %p99 = scmp.ne.s32.totalorder %s84, %s98
      %p100 = scmp.eq.s32.totalorder %s18, 0
      %p101 = por %p99, %p100
      %s102 = ssub.s32 %s19, %s31
      %p103 = scmp.eq.s32.totalorder %s102, 0
      %s105 = sadd.s32 %s104, 1
      %s106 = scalar_select %p103, %s104, %s105
      %p109 = pneg %p103
      %p110 = scmp.eq.s32.totalorder %s12, 3
      %p111 = por %p109, %p110
      %p112 = scmp.ne.s32.totalorder %s104, %s107
      %p113 = scmp.eq.s32.totalorder %s12, 0
      %p114 = por %p112, %p113
      %p115 = scmp.ne.s32.totalorder %s104, %s107
      %p116 = scmp.eq.s32.totalorder %s17, 3
      %p117 = por %p115, %p116
      %p118 = scmp.ne.s32.totalorder %s107, %s108
      %p119 = scmp.eq.s32.totalorder %s17, 0
      %p120 = por %p118, %p119
      %p121 = scmp.ne.s32.totalorder %s107, %s108
      %p122 = scmp.eq.s32.totalorder %s18, 3
      %p123 = por %p121, %p122
      %p125 = scmp.ne.s32.totalorder %s108, %s124
      %p126 = scmp.eq.s32.totalorder %s18, 0
      %p127 = por %p125, %p126
      %p128 = scmp.le.s32.totalorder 1, %s12
      %p129 = scmp.lt.s32.totalorder %s12, 5
      %p130 = pnand %p128, %p129
      %p131 = pneg %p130
      // Predicated region
      $region9: #{tpu_custom_call.1} parent=5 // pred_check
        _
      $region10: #{tpu_custom_call.1} parent=5 // pred_check_branch
        %133 = sbr.rel (%p130) target = $region12
      $region11: #{tpu_custom_call.1} parent=5 // pred_region
        %s134 = ssub.s32 %s12, 1
        // Predicated region
        $region13: #{tpu_custom_call.1} parent=11 // pred_check
          %p135 = pneg %p73
        $region14: #{tpu_custom_call.1} parent=11 // pred_check_branch
          %137 = sbr.rel (%p135) target = $region16
        $region15: #{tpu_custom_call.1} parent=11 // pred_region
          _
        $region16: #{tpu_custom_call.1} parent=11 // pred_fallthru
          _
        // Predicated region
        $region17: #{tpu_custom_call.1} parent=11 // pred_check
          %p138 = pneg %p94
        $region18: #{tpu_custom_call.1} parent=11 // pred_check_branch
          %140 = sbr.rel (%p138) target = $region20
        $region19: #{tpu_custom_call.1} parent=11 // pred_region
          _
        $region20: #{tpu_custom_call.1} parent=11 // pred_fallthru
          _
      $region12: #{tpu_custom_call.1} parent=5 // pred_fallthru
        _
      %p141 = scmp.lt.s32.totalorder %s12, 4
      // Predicated region
      $region21: #{tpu_custom_call.1} parent=5 // pred_check
        %p142 = pneg %p141
      $region22: #{tpu_custom_call.1} parent=5 // pred_check_branch
        %144 = sbr.rel (%p142) target = $region24
      $region23: #{tpu_custom_call.1} parent=5 // pred_region
        // Predicated region
        $region25: #{tpu_custom_call.1} parent=23 // pred_check
          %p145 = pneg %p46
        $region26: #{tpu_custom_call.1} parent=23 // pred_check_branch
          %147 = sbr.rel (%p145) target = $region28
        $region27: #{tpu_custom_call.1} parent=23 // pred_region
          %s148 = sand.u32 %s36, 1
          %s149 = scalar_lea.sflag [#allocation5], %s148
          %s150 = sand.u32 %s36, 1
          %s151 = smul.addr %s150, 8
          %s152 = scalar_lea.vmem [#allocation4], %s151
          %154 = vsyncadd %s149, 0
          %s155 = smul.addr %s19, 2
          %s156 = sadd.s32 %s20, %s155
          %s157 = smul.addr %s156, 8
          %s158 = scalar_lea.hbm %s0, %s157
          %s160 = sshll.u32 %s158, 4
          %s161 = int_to_ptr.hbm [resolvable:$true] %s160
          %s162 = sshll.u32 %s152, 4
          %s163 = int_to_ptr.vmem [resolvable:$true] %s162
          %165 = dma.hbm_to_vmem [thread:$0]  %s161, 128, %s163, %s149
        $region28: #{tpu_custom_call.1} parent=23 // pred_fallthru
          _
      $region24: #{tpu_custom_call.1} parent=5 // pred_fallthru
        _
      %p166 = scmp.le.s32.totalorder 1, %s12
      %p167 = scmp.lt.s32.totalorder %s12, 5
      %p168 = pnand %p166, %p167
      %p169 = pneg %p168
      // Predicated region
      $region29: #{tpu_custom_call.1} parent=5 // pred_check
        _
      $region30: #{tpu_custom_call.1} parent=5 // pred_check_branch
        %171 = sbr.rel (%p168) target = $region32
      $region31: #{tpu_custom_call.1} parent=5 // pred_region
        %s172 = ssub.s32 %s12, 1
        %s173 = sand.u32 %s39, 1
        %s174 = scalar_lea.sflag [#allocation5], %s173
        %s175 = sand.u32 %s39, 1
        %s176 = smul.addr %s175, 8
        %s177 = scalar_lea.vmem [#allocation4], %s176
        // Predicated region
        $region33: #{tpu_custom_call.1} parent=31 // pred_check
          %p178 = pneg %p52
        $region34: #{tpu_custom_call.1} parent=31 // pred_check_branch
          %180 = sbr.rel (%p178) target = $region36
        $region35: #{tpu_custom_call.1} parent=31 // pred_region
          %182 = dma.done %s174, 128
        $region36: #{tpu_custom_call.1} parent=31 // pred_fallthru
          _
        %s183 = sand.u32 %s39, 1
        %s184 = scalar_lea.sflag [#allocation5], %s183
        %s185 = sand.u32 %s39, 1
        %s186 = smul.addr %s185, 8
        %s187 = scalar_lea.vmem [#allocation4], %s186
        %p188 = pneg %p52
        %p189 = pneg %p49
        %p190 = pneg %p73
        %p191 = pneg %p70
        %p192 = pneg %p94
        %p193 = pneg %p91
        %p194 = pneg %p120
        %p195 = pneg %p117
        %p196 = scmp.lt.s32.totalorder %s21, 1
        %s197 = scalar_select %p196, %s21, 1
        %s198 = smul.addr %s197, 8
        %s199 = scalar_lea.vmem %s3, %s198
        %p200 = scmp.lt.s32.totalorder %s21, 1
        %s201 = scalar_select %p200, %s21, 1
        %s202 = smul.addr %s201, 8
        %s203 = scalar_lea.vmem %s3, %s202
        %p204 = scmp.eq.s32.totalorder %s22, 0
        // Predicated region
        $region37: #{tpu_custom_call.1} parent=31 // pred_check
          %p205 = pneg %p204
        $region38: #{tpu_custom_call.1} parent=31 // pred_check_branch
          %207 = sbr.rel (%p205) target = $region40
        $region39: #{tpu_custom_call.1} parent=31 // pred_region
          %vm208 = vcmask 7168
          %209 = vst.msk [vmem:[#allocation2] sm:$0xff] %vm208, 0.0
          %210 = vst.msk [vmem:[#allocation3] sm:$0xff] %vm208, -inf
        $region40: #{tpu_custom_call.1} parent=31 // pred_fallthru
          _
        %v211 = vld [vmem:[%s177] sm:$0xff]
        %v212 = vld [vmem:[#allocation2] sm:$0xff]
        %213 = vadd.xlane.f32.xlu0 %v211
        %v214 = vpop.xlane.xlu0 %213
        %v215 = vadd.f32 %v212, %v214
        %vm216 = vcmask 7168
        %217 = vst.msk [vmem:[#allocation2] sm:$0xff] %vm216, %v215
        %v218 = vld [vmem:[#allocation3] sm:$0xff]
        %219 = vmax.xlane.f32.xlu0 %v211
        %v220 = vpop.xlane.xlu0 %219
        %v221 = vmax.f32 %v218, %v220
        %222 = vst.msk [vmem:[#allocation3] sm:$0xff] %vm216, %v221
        %p223 = scmp.eq.s32.totalorder %s22, 1
        // Predicated region
        $region41: #{tpu_custom_call.1} parent=31 // pred_check
          %p224 = pneg %p223
        $region42: #{tpu_custom_call.1} parent=31 // pred_check_branch
          %226 = sbr.rel (%p224) target = $region44
        $region43: #{tpu_custom_call.1} parent=31 // pred_region
          %v227 = vld [vmem:[#allocation2] sm:$0xff]
          %v228 = vmul.f32 %v227, 0.00390625
          %v229 = vld [vmem:[#allocation3] sm:$0xff]
          %231 = vrot.lane.b32.xlu0 %v229, 1
          %v232 = vpop.permute.xlu0 %231
          %v234 = vsel %vm216, %v228, %v232
          %v235 = vld [vmem:[%s1] sm:$0xf]
          %vm236 = vcmask 64512
          %v238 = vsel %vm236, %v235, 0
          %240 = vmatpush.msra.mxu0 0.0
          %241 = vmatpush.msra.mxu0 0.0
          %242 = vmatpush.msra.mxu0 0.0
          %243 = vmatpush.msra.mxu0 0.0
          %244 = vmatpush.msra.mxu0 0.0
          %245 = vmatpush.msra.mxu0 0.0
          %246 = vmatpush.msra.mxu0 0.0
          %247 = vmatpush.msra.mxu0 0.0
          %248 = vmatpush.msra.mxu0 0.0
          %249 = vmatpush.msra.mxu0 0.0
          %250 = vmatpush.msra.mxu0 0.0
          %251 = vmatpush.msra.mxu0 0.0
          %252 = vmatpush.msra.mxu0 0.0
          %253 = vmatpush.msra.mxu0 0.0
          %254 = vmatpush.msra.mxu0 0.0
          %255 = vmatpush.msra.mxu0 %v234
          %256 = vmatmul.f32.gmra.mxu0 %v238
          %v257 = vpop.f32.mrf.mxu0
          %v258 = vadd.f32 0.0, %v257
          %259 = vdwg.mxu0
          %v260 = vmax.f32 %v258, 0.0
          %v261 = vld [vmem:[%s2] sm:$0xff]
          %vm262 = vcmask 31744
          %v264 = vsel %vm262, %v261, 0
          %vm266 = vcmask 1043456
          %v268 = vsel %vm266, %v260, 0
          %270 = vmatpush.msra.mxu0 0.0
          %271 = vmatpush.msra.mxu0 0.0
          %272 = vmatpush.msra.mxu0 0.0
          %273 = vmatpush.msra.mxu0 0.0
          %274 = vmatpush.msra.mxu0 0.0
          %275 = vmatpush.msra.mxu0 0.0
          %276 = vmatpush.msra.mxu0 0.0
          %277 = vmatpush.msra.mxu0 0.0
          %278 = vmatpush.msra.mxu0 0.0
          %279 = vmatpush.msra.mxu0 0.0
          %280 = vmatpush.msra.mxu0 0.0
          %281 = vmatpush.msra.mxu0 0.0
          %282 = vmatpush.msra.mxu0 0.0
          %283 = vmatpush.msra.mxu0 0.0
          %284 = vmatpush.msra.mxu0 0.0
          %285 = vmatpush.msra.mxu0 %v268
          %286 = vmatmul.f32.gmra.mxu0 %v264
          %v287 = vpop.f32.mrf.mxu0
          %v288 = vadd.f32 0.0, %v287
          %289 = vdwg.mxu0
          %291 = vrot.lane.b32.xlu0 %v288, 127
          %v292 = vpop.permute.xlu0 %291
          %v294 = vadd.f32 %v288, %v292
          %295 = vst.msk [vmem:[%s203] sm:$0xff] %vm216, %v294
        $region44: #{tpu_custom_call.1} parent=31 // pred_fallthru
          _
        %p296 = scmp.lt.s32.totalorder %s21, 1
        %s297 = scalar_select %p296, %s21, 1
        %s298 = smul.addr %s297, 8
        %s299 = scalar_lea.vmem %s3, %s298
        // Predicated region
        $region45: #{tpu_custom_call.1} parent=31 // pred_check
          %p300 = pneg %p117
        $region46: #{tpu_custom_call.1} parent=31 // pred_check_branch
          %302 = sbr.rel (%p300) target = $region48
        $region47: #{tpu_custom_call.1} parent=31 // pred_region
          _
        $region48: #{tpu_custom_call.1} parent=31 // pred_fallthru
          _
      $region32: #{tpu_custom_call.1} parent=5 // pred_fallthru
        _
      %p303 = scmp.le.s32.totalorder 2, %s12
      // Predicated region
      $region49: #{tpu_custom_call.1} parent=5 // pred_check
        %p304 = pneg %p303
      $region50: #{tpu_custom_call.1} parent=5 // pred_check_branch
        %306 = sbr.rel (%p304) target = $region52
      $region51: #{tpu_custom_call.1} parent=5 // pred_region
        %s307 = ssub.s32 %s12, 2
        // Predicated region
        $region53: #{tpu_custom_call.1} parent=51 // pred_check
          %p308 = pneg %p123
        $region54: #{tpu_custom_call.1} parent=51 // pred_check_branch
          %310 = sbr.rel (%p308) target = $region56
        $region55: #{tpu_custom_call.1} parent=51 // pred_region
          %p311 = scmp.lt.s32.totalorder %s23, 1
          %s312 = scalar_select %p311, %s23, 1
          %s313 = smul.addr %s312, 8
          %s314 = scalar_lea.vmem %s3, %s313
        $region56: #{tpu_custom_call.1} parent=51 // pred_fallthru
          _
      $region52: #{tpu_custom_call.1} parent=5 // pred_fallthru
        _
    $region6: #{tpu_custom_call.1} parent=1 // loop_footer
      %s16 = sadd.s32 1, %s12
    $region7: #{tpu_custom_call.1} parent=1 // loop_footer_branch
      %11 = sbr.rel target = $region3
    $region8: #{tpu_custom_call.1} parent=1 // loop_exit
      _
    %315 = vsyncpa [#allocation5], 1
    %s316 = scalar_lea.sflag [#allocation5], 1
    %317 = vsyncpa %s316, 1

</llo_original>
